<compile_context>
chip_gen: v5e
topology: v5e:2x2
jax: 0.10.0
libtpu: 0.0.40
codegen_flags: <defaults>
</compile_context>

<pallas_src>
import functools

import jax
import jax.numpy as jnp
from jax.experimental import pallas as pl
from jax.experimental.pallas import tpu as pltpu


# ---------------------------------------------------------------------------
# helpers
# ---------------------------------------------------------------------------
def _largest_divisor_not_exceeding(n, cap):
    cap = max(1, min(n, int(cap)))
    for d in range(cap, 0, -1):
        if n % d == 0:
            return d
    return 1


def _tpu_vmem_and_cores():
    """Physical VMEM bytes per TensorCore and TensorCore count (best effort)."""
    vmem_cap = 64 << 20          # conservative fallback (v7x-sized)
    num_cores = 1
    try:
        info = pltpu.get_tpu_info()
        cap = int(getattr(info, "vmem_capacity_bytes", vmem_cap))
        if cap > 0:
            vmem_cap = cap
        num_cores = 0
        for attr in ("num_tensorcores", "tensorcore_count", "num_cores", "core_count"):
            val = getattr(info, attr, None)
            if val:
                num_cores = int(val)
                break
        if num_cores <= 0:
            # 64 MiB/TC parts (v7x) have 2 TensorCores; 128 MiB parts have 1.
            num_cores = 2 if vmem_cap <= (64 << 20) else 1
    except Exception:
        num_cores = 2 if vmem_cap <= (64 << 20) else 1
    return vmem_cap, num_cores


def _sigmoid(x):
    # f32 form: exp overflow -> inf -> 1/inf = 0 is the correct limit.
    return 1.0 / (1.0 + jnp.exp(-x))


# ---------------------------------------------------------------------------
# fused single-pass kernel: pool -> fc1 -> relu -> fc2 -> sigmoid -> scale
# (whole feature map of a batch tile resident per grid step)
# ---------------------------------------------------------------------------
def _se_fused_kernel(x_ref, w1t_ref, w2t_ref, o_ref):
    x = x_ref[...]                                    # (Bt, C, HW), native dtype
    hw = x.shape[-1]

    # AdaptiveAvgPool2d(1): global mean, f32 accumulation (no full-tile f32 copy).
    y = jnp.sum(x, axis=-1, dtype=jnp.float32) * jnp.float32(1.0 / hw)    # (Bt, C)

    y1 = jnp.maximum(
        jnp.dot(y, w1t_ref[...].astype(jnp.float32),
                preferred_element_type=jnp.float32), 0.0)                 # (Bt, Cr)
    s = _sigmoid(
        jnp.dot(y1, w2t_ref[...].astype(jnp.float32),
                preferred_element_type=jnp.float32))                      # (Bt, C)

    # Channel-wise rescale in the activation dtype (no f32 copy of x).
    o_ref[...] = (x * s.astype(x.dtype)[:, :, None]).astype(o_ref.dtype)


# ---------------------------------------------------------------------------
# two-phase path (HW tiled) — phase A: pool(accumulate) + FC + sigmoid
# ---------------------------------------------------------------------------
def _se_pool_fc_kernel(x_ref, w1t_ref, w2t_ref, s_ref, acc_ref, *, inv_hw):
    h = pl.program_id(1)

    @pl.when(h == 0)
    def _():
        acc_ref[...] = jnp.zeros_like(acc_ref)

    acc_ref[...] += jnp.sum(x_ref[...], axis=-1, keepdims=True,
                            dtype=jnp.float32)        # (1, C, 1)

    @pl.when(h == pl.num_programs(1) - 1)
    def _():
        y = acc_ref[...][:, :, 0] * jnp.float32(inv_hw)                   # (1, C)
        y1 = jnp.maximum(
            jnp.dot(y, w1t_ref[...].astype(jnp.float32),
                    preferred_element_type=jnp.float32), 0.0)             # (1, Cr)
        s = _sigmoid(
            jnp.dot(y1, w2t_ref[...].astype(jnp.float32),
                    preferred_element_type=jnp.float32))                  # (1, C)
        s_ref[...] = s.astype(s_ref.dtype)[:, :, None]                    # (1, C, 1)


# two-phase path — phase B: channel-wise rescale of each HW tile
def _se_scale_kernel(x_ref, s_ref, o_ref):
    # s_ref already holds the scale in the activation dtype.
    o_ref[...] = (x_ref[...] * s_ref[...]).astype(o_ref.dtype)


# ---------------------------------------------------------------------------
# wrapper
# ---------------------------------------------------------------------------
def se_forward(x, w1, w2, *, tile_budget_bytes=None):
    """SE forward.  x: (B, C, H, W) NCHW.
    w1: (C//r, C), w2: (C, C//r)  (PyTorch nn.Linear weight layout, bias=False).

    tile_budget_bytes: max native-dtype bytes of x per tile; derived from the
    chip's VMEM when None (override only for testing)."""
    B, C, H, W = x.shape
    HW = H * W
    Cr, Cin = w1.shape
    assert Cin == C and w2.shape == (C, Cr)

    itemsize = x.dtype.itemsize
    vmem_cap, num_cores = _tpu_vmem_and_cores()
    usable = min(vmem_cap * 3 // 4, 100 << 20)       # scoped-VMEM ceiling we allow
    # Per native byte of x in a tile: 2x double-buffered input + 2x output +
    # 1 temp tile (native dtype) plus an f32 allowance for the pool accumulation.
    cost_per_byte = 5.0 + 4.0 / itemsize
    if tile_budget_bytes is None:
        tile_budget_bytes = int(max(1 << 20, (usable - (6 << 20)) / cost_per_byte))

    def _vmem_limit(tile_native_bytes):
        want = int(tile_native_bytes * cost_per_byte) + (8 << 20)
        return int(min(max(usable, 16 << 20), max(16 << 20, want)))

    xf = x.reshape(B, C, HW)
    # Pre-transpose the weights once so in-kernel matmuls contract on the
    # MXU-native axis (no per-grid-step weight relayout inside the kernel).
    w1t = w1.T                                        # (C, Cr)
    w2t = w2.T                                        # (Cr, C)

    per_elem = C * HW * itemsize                      # one batch element, native dtype

    if per_elem <= tile_budget_bytes:
        # ---------------- fused single-pass path ----------------
        Bt = _largest_divisor_not_exceeding(B, max(1, tile_budget_bytes // per_elem))
        # Expose at least num_cores grid steps on multi-TensorCore parts (v7x),
        # but never halve tiles on single-TC chips.
        if (num_cores > 1 and (B // Bt) < num_cores and B >= num_cores
                and Bt * per_elem >= (256 << 10)):
            Bt = _largest_divisor_not_exceeding(B, max(1, B // num_cores))

        out = pl.pallas_call(
            _se_fused_kernel,
            out_shape=jax.ShapeDtypeStruct((B, C, HW), x.dtype),
            grid_spec=pltpu.PrefetchScalarGridSpec(
                num_scalar_prefetch=0,
                grid=(B // Bt,),
                in_specs=[
                    pl.BlockSpec((Bt, C, HW), lambda b: (b, 0, 0)),
                    pl.BlockSpec((C, Cr), lambda b: (0, 0)),
                    pl.BlockSpec((Cr, C), lambda b: (0, 0)),
                ],
                out_specs=pl.BlockSpec((Bt, C, HW), lambda b: (b, 0, 0)),
            ),
            compiler_params=pltpu.CompilerParams(
                dimension_semantics=("parallel",),
                vmem_limit_bytes=_vmem_limit(Bt * per_elem)),
        )(xf, w1t, w2t)
        return out.reshape(B, C, H, W)

    # ---------------- two-phase path (large feature maps) ----------------
    # Zero-pad H*W to a multiple of 128: the sum is unaffected by zero pads,
    # the mean divides by the true H*W, and the padded output is sliced off.
    HW_pad = ((HW + 127) // 128) * 128
    if HW_pad != HW:
        xf = jnp.pad(xf, ((0, 0), (0, 0), (0, HW_pad - HW)))
    n128 = HW_pad // 128
    per_row = C * 128 * itemsize
    t128 = _largest_divisor_not_exceeding(n128, max(1, tile_budget_bytes // per_row))
    tHW = t128 * 128
    tile_native = C * tHW * itemsize
    vmem_limit = _vmem_limit(tile_native)

    # Phase A: per-channel mean (accumulated over HW tiles) -> fc1 -> relu ->
    # fc2 -> sigmoid, producing (B, C, 1) scales in the activation dtype.
    scales = pl.pallas_call(
        functools.partial(_se_pool_fc_kernel, inv_hw=1.0 / HW),
        out_shape=jax.ShapeDtypeStruct((B, C, 1), x.dtype),
        grid_spec=pltpu.PrefetchScalarGridSpec(
            num_scalar_prefetch=0,
            grid=(B, HW_pad // tHW),
            in_specs=[
                pl.BlockSpec((1, C, tHW), lambda b, h: (b, 0, h)),
                pl.BlockSpec((C, Cr), lambda b, h: (0, 0)),
                pl.BlockSpec((Cr, C), lambda b, h: (0, 0)),
            ],
            out_specs=pl.BlockSpec((1, C, 1), lambda b, h: (b, 0, 0)),
            scratch_shapes=[pltpu.VMEM((1, C, 1), jnp.float32)],
        ),
        compiler_params=pltpu.CompilerParams(
            dimension_semantics=("parallel", "arbitrary"),
            vmem_limit_bytes=vmem_limit),
    )(xf, w1t, w2t)

    # Phase B: rescale each HW tile by its channel scale.
    out = pl.pallas_call(
        _se_scale_kernel,
        out_shape=jax.ShapeDtypeStruct((B, C, HW_pad), x.dtype),
        grid_spec=pltpu.PrefetchScalarGridSpec(
            num_scalar_prefetch=0,
            grid=(B, HW_pad // tHW),
            in_specs=[
                pl.BlockSpec((1, C, tHW), lambda b, h: (b, 0, h)),
                pl.BlockSpec((1, C, 1), lambda b, h: (b, 0, 0)),
            ],
            out_specs=pl.BlockSpec((1, C, tHW), lambda b, h: (b, 0, h)),
        ),
        compiler_params=pltpu.CompilerParams(
            dimension_semantics=("parallel", "parallel"),
            vmem_limit_bytes=vmem_limit),
    )(xf, scales)

    if HW_pad != HW:
        out = out[:, :, :HW]
    return out.reshape(B, C, H, W)


def se_reference(x, w1, w2):
    """Pure-JAX reference mirroring the PyTorch forward."""
    y = jnp.mean(x, axis=(2, 3))                 # (B, C)
    y = jnp.maximum(y @ w1.T, 0.0)               # (B, C//r)
    y = jax.nn.sigmoid(y @ w2.T)                 # (B, C)
    return x * y[:, :, None, None]


if __name__ == "__main__":
    # Module config: SE(channel=8, ratio=4) -> fc1: (2, 8), fc2: (8, 2)
    B, C, H, W = 2, 8, 16, 16
    ratio = 4
    Cr = C // ratio

    key = jax.random.PRNGKey(0)
    kx, k1, k2 = jax.random.split(key, 3)

    x = jax.random.normal(kx, (B, C, H, W), dtype=jnp.float32)
    bound1 = 1.0 / (C ** 0.5)
    bound2 = 1.0 / (Cr ** 0.5)
    w1 = jax.random.uniform(k1, (Cr, C), jnp.float32, -bound1, bound1)   # fc1.weight
    w2 = jax.random.uniform(k2, (C, Cr), jnp.float32, -bound2, bound2)   # fc2.weight

    ref = se_reference(x, w1, w2)

    # Fused single-pass path (VMEM-aware budget; whole feature map per tile).
    out_fused = jax.block_until_ready(se_forward(x, w1, w2))
    assert out_fused.shape == (B, C, H, W)
    assert jnp.allclose(out_fused, ref, atol=1e-5, rtol=1e-5), "fused path mismatch"

    # Two-phase (HW-tiled) path, forced via a tiny tile budget — the path
    # feature maps too large for VMEM take.
    out_2p = jax.block_until_ready(
        se_forward(x, w1, w2, tile_budget_bytes=C * 128 * 4))
    assert jnp.allclose(out_2p, ref, atol=1e-5, rtol=1e-5), "two-phase path mismatch"

    # Two-phase path with H*W not a multiple of 128 (wrapper-side zero padding).
    x2 = jax.random.normal(kx, (B, C, 10, 10), dtype=jnp.float32)
    ref2 = se_reference(x2, w1, w2)
    out_2p_pad = jax.block_until_ready(se_forward(x2, w1, w2, tile_budget_bytes=64))
    assert jnp.allclose(out_2p_pad, ref2, atol=1e-5, rtol=1e-5), "padded path mismatch"

    print("KERNEL_OK")
</pallas_src>

<mosaic_0001>
module attributes {stable_mosaic.version = 11 : i64} {
  func.func @_se_fused_kernel(%arg0: i32, %arg1: memref<2x8x256xf32, #tpu.memory_space<vmem>>, %arg2: memref<8x2xf32, #tpu.memory_space<vmem>>, %arg3: memref<2x8xf32, #tpu.memory_space<vmem>>, %arg4: memref<2x8x256xf32, #tpu.memory_space<vmem>>) attributes {dimension_semantics = [#tpu.dimension_semantics<parallel>], iteration_bounds = array<i64: 1>, scalar_prefetch = 0 : i64, scratch_operands = 0 : i64, tpu.core_type = #tpu.core_type<tc>, window_params = [{transform_indices = @transform_0, window_bounds = array<i64: 2, 8, 256>}, {pipeline_mode = #tpu.pipeline_mode<synchronous>, transform_indices = @transform_1, window_bounds = array<i64: 8, 2>}, {pipeline_mode = #tpu.pipeline_mode<synchronous>, transform_indices = @transform_2, window_bounds = array<i64: 2, 8>}, {transform_indices = @transform_3, window_bounds = array<i64: 2, 8, 256>}]} {
    %c0 = arith.constant 0 : index
    %c0_0 = arith.constant 0 : index
    %c0_1 = arith.constant 0 : index
    %0 = vector.load %arg1[%c0, %c0_0, %c0_1] : memref<2x8x256xf32, #tpu.memory_space<vmem>>, vector<2x8x256xf32>
    %cst = arith.constant dense<0.000000e+00> : vector<2x8xf32>
    %1 = vector.multi_reduction <add>, %0, %cst [2] : vector<2x8x256xf32> to vector<2x8xf32>
    %cst_2 = arith.constant 3.906250e-03 : f32
    %2 = vector.broadcast %cst_2 : f32 to vector<2x8xf32>
    %3 = arith.mulf %1, %2 : vector<2x8xf32>
    %c0_3 = arith.constant 0 : index
    %c0_4 = arith.constant 0 : index
    %4 = vector.load %arg2[%c0_3, %c0_4] : memref<8x2xf32, #tpu.memory_space<vmem>>, vector<8x2xf32>
    %cst_5 = arith.constant dense<0.000000e+00> : vector<2x2xf32>
    %5 = tpu.matmul %3, %4, %cst_5 {dimension_numbers = #tpu.dot_dimension_numbers<[1], [0], [0], [1], [0, 0, 1, 1], [], []>} : vector<2x8xf32>, vector<8x2xf32>, vector<2x2xf32> -> vector<2x2xf32>
    %cst_6 = arith.constant 0.000000e+00 : f32
    %6 = vector.broadcast %cst_6 : f32 to vector<2x2xf32>
    %7 = arith.maximumf %5, %6 : vector<2x2xf32>
    %c0_7 = arith.constant 0 : index
    %c0_8 = arith.constant 0 : index
    %8 = vector.load %arg3[%c0_7, %c0_8] : memref<2x8xf32, #tpu.memory_space<vmem>>, vector<2x8xf32>
    %cst_9 = arith.constant dense<0.000000e+00> : vector<2x8xf32>
    %9 = tpu.matmul %7, %8, %cst_9 {dimension_numbers = #tpu.dot_dimension_numbers<[1], [0], [0], [1], [0, 0, 1, 1], [], []>} : vector<2x2xf32>, vector<2x8xf32>, vector<2x8xf32> -> vector<2x8xf32>
    %cst_10 = arith.constant 0.000000e+00 : f32
    %10 = vector.broadcast %cst_10 : f32 to vector<2x8xf32>
    %11 = arith.subf %10, %9 : vector<2x8xf32>
    %12 = math.exp %11 : vector<2x8xf32>
    %cst_11 = arith.constant 1.000000e+00 : f32
    %13 = vector.broadcast %cst_11 : f32 to vector<2x8xf32>
    %14 = arith.addf %13, %12 : vector<2x8xf32>
    %cst_12 = arith.constant 1.000000e+00 : f32
    %15 = vector.broadcast %cst_12 : f32 to vector<2x8xf32>
    %16 = arith.divf %15, %14 : vector<2x8xf32>
    %17 = vector.shape_cast %16 : vector<2x8xf32> to vector<2x8x1xf32>
    %18 = vector.broadcast %17 : vector<2x8x1xf32> to vector<2x8x256xf32>
    %19 = arith.mulf %0, %18 : vector<2x8x256xf32>
    %c0_13 = arith.constant 0 : index
    %c0_14 = arith.constant 0 : index
    %c0_15 = arith.constant 0 : index
    %20 = vector.load %arg4[%c0_13, %c0_14, %c0_15] : memref<2x8x256xf32, #tpu.memory_space<vmem>>, vector<2x8x256xf32>
    tpu.vector_store %arg4[%c0_13, %c0_14, %c0_15], %19 {strides = array<i32>} : memref<2x8x256xf32, #tpu.memory_space<vmem>>, vector<2x8x256xf32>,
    return
  }
  func.func @transform_0(%arg0: i32) -> (i32, i32, i32) {
    %c0_i32 = arith.constant 0 : i32
    %c0_i32_0 = arith.constant 0 : i32
    %c0_i32_1 = arith.constant 0 : i32
    return %arg0, %c0_i32, %c0_i32_0 : i32, i32, i32
  }
  func.func @transform_1(%arg0: i32) -> (i32, i32) {
    %c0_i32 = arith.constant 0 : i32
    %c0_i32_0 = arith.constant 0 : i32
    %c0_i32_1 = arith.constant 0 : i32
    return %c0_i32, %c0_i32_0 : i32, i32
  }
  func.func @transform_2(%arg0: i32) -> (i32, i32) {
    %c0_i32 = arith.constant 0 : i32
    %c0_i32_0 = arith.constant 0 : i32
    %c0_i32_1 = arith.constant 0 : i32
    return %c0_i32, %c0_i32_0 : i32, i32
  }
  func.func @transform_3(%arg0: i32) -> (i32, i32, i32) {
    %c0_i32 = arith.constant 0 : i32
    %c0_i32_0 = arith.constant 0 : i32
    %c0_i32_1 = arith.constant 0 : i32
    return %arg0, %c0_i32, %c0_i32_0 : i32, i32, i32
  }
}

</mosaic_0001>

<llo_original>
// kernel: tpu_custom_call.1
$region0: #{tpu_custom_call.1}
  #allocation0 [shape = 'u32[]', space=smem, size = 0x4, offset = 0x4, fixed_abs, tag = 'smem constant byte address 0x4 - core index']
  #allocation1 [shape = 'u32[72,128]{1,0:T(1,128)}', space=vmem, size = 0x9000, scoped, tag = 'internal scratch']
  %s0 = inlined_call_operand.hbm [shape: f32[2,8,256], index: 0, kind: input, shape index: {}]
  %s1 = inlined_call_operand.vmem [shape: f32[8,2], index: 1, kind: input, shape index: {}]
  %s2 = inlined_call_operand.vmem [shape: f32[2,8], index: 2, kind: input, shape index: {}]
  %s3 = inlined_call_operand.hbm [shape: f32[2,8,256], index: 3, kind: output, shape index: {}]
  %s4 = sld [smem:[#allocation0]]
  $region26: #{tpu_custom_call.1} parent=0
    _
  %s6 = ssub.s32 1, %s4
  %s7 = scalar_select 0, %s6, %s4
  $region1: #{tpu_custom_call.1} parent=0
    #allocation2 [shape = 'u8[16384]{0}', space=vmem, size = 0x4000, scoped, tag = 'input window, operand 0, single buffered']
    #allocation3 [shape = 's32[1]{0}', space=sflag, size = 0x4, scoped, tag = 'scoped memory for tpu_custom_call.1']
    #allocation4 [shape = 's32[1]{0}', space=sflag, size = 0x4, scoped, tag = 'scoped memory for tpu_custom_call.1']
    #allocation5 [shape = 'u8[16384]{0}', space=vmem, size = 0x4000, scoped, tag = 'output window, operand 0, single buffered']
    %8 = vsyncpa [#allocation3], 0
    %9 = vsyncpa [#allocation4], 0
    // Predicated region
    $region2: #{tpu_custom_call.1} parent=1 // pred_check
      _
    $region3: #{tpu_custom_call.1} parent=1 // pred_check_branch
      %11 = sbr.rel (0) target = $region5
    $region4: #{tpu_custom_call.1} parent=1 // pred_region
      %13 = vsyncadd [#allocation3], 0
      %s14 = sshll.u32 %s0, 4
      %s15 = int_to_ptr.hbm [resolvable:$true] %s14
      %s16 = sshll.u32 [#allocation2], 4
      %s17 = int_to_ptr.vmem [resolvable:$true] %s16
      %22 = dma.hbm_to_vmem [thread:$0]  %s15, 512, %s17, [#allocation3], 256, 256, 16
    $region5: #{tpu_custom_call.1} parent=1 // pred_fallthru
      _
    // Predicated region
    $region6: #{tpu_custom_call.1} parent=1 // pred_check
      _
    $region7: #{tpu_custom_call.1} parent=1 // pred_check_branch
      %24 = sbr.rel (0) target = $region9
    $region8: #{tpu_custom_call.1} parent=1 // pred_region
      _
    $region9: #{tpu_custom_call.1} parent=1 // pred_fallthru
      _
    // Predicated region
    $region10: #{tpu_custom_call.1} parent=1 // pred_check
      _
    $region11: #{tpu_custom_call.1} parent=1 // pred_check_branch
      %26 = sbr.rel (0) target = $region13
    $region12: #{tpu_custom_call.1} parent=1 // pred_region
      _
    $region13: #{tpu_custom_call.1} parent=1 // pred_fallthru
      _
    // Predicated region
    $region14: #{tpu_custom_call.1} parent=1 // pred_check
      _
    $region15: #{tpu_custom_call.1} parent=1 // pred_check_branch
      %28 = sbr.rel (0) target = $region17
    $region16: #{tpu_custom_call.1} parent=1 // pred_region
      %30 = dma.done [#allocation3], 512
    $region17: #{tpu_custom_call.1} parent=1 // pred_fallthru
      _
    %v31 = vld [vmem:[#allocation2] sm:$0xff]
    %v32 = vld [vmem:[#allocation2 + $0x8] sm:$0xff]
    %v33 = vld [vmem:[#allocation2 + $0x10] sm:$0xff]
    %v34 = vld [vmem:[#allocation2 + $0x18] sm:$0xff]
    %v35 = vadd.f32 %v31, %v32
    %36 = vadd.xlane.f32.xlu0 %v35
    %v37 = vpop.xlane.xlu0 %36
    %v38 = vadd.f32 %v33, %v34
    %39 = vadd.xlane.f32.xlu0 %v38
    %v40 = vpop.xlane.xlu0 %39
    %v41 = vmul.f32 %v37, 0.00390625
    %v42 = vmul.f32 %v40, 0.00390625
    %v43 = vld [vmem:[%s1] sm:$0xff]
    %v46 = vlaneseq
    %v47 = vand.u32 %v46, 127
    %v48 = vperm.slane %v41, %v47
    %v49 = vperm.slane %v42, %v47
    %vm50 = vcmask 1041409
    %v51 = vsel %vm50, %v49, %v48
    %vm52 = vcmask 64512
    %v53 = vsel %vm52, %v51, 0
    %55 = vmatpush.msra.mxu0 0.0
    %56 = vmatpush.msra.mxu0 0.0
    %57 = vmatpush.msra.mxu0 0.0
    %58 = vmatpush.msra.mxu0 0.0
    %59 = vmatpush.msra.mxu0 0.0
    %60 = vmatpush.msra.mxu0 0.0
    %61 = vmatpush.msra.mxu0 0.0
    %62 = vmatpush.msra.mxu0 0.0
    %63 = vmatpush.msra.mxu0 0.0
    %64 = vmatpush.msra.mxu0 0.0
    %65 = vmatpush.msra.mxu0 0.0
    %66 = vmatpush.msra.mxu0 0.0
    %67 = vmatpush.msra.mxu0 0.0
    %68 = vmatpush.msra.mxu0 0.0
    %69 = vmatpush.msra.mxu0 0.0
    %70 = vmatpush.msra.mxu0 %v43
    %71 = vmatmul.f32.gmra.mxu0 %v53
    %v72 = vpop.f32.mrf.mxu0
    %v73 = vadd.f32 0.0, %v72
    %74 = vdwg.mxu0
    %v75 = vmax.f32 %v73, 0.0
    %v76 = vld [vmem:[%s2] sm:$0x3]
    %vm77 = vcmask 15360
    %v79 = vsel %vm77, %v75, 0
    %vm81 = vcmask 1041408
    %v83 = vsel %vm81, %v76, 0
    %85 = vmatpush.msra.mxu0 0.0
    %86 = vmatpush.msra.mxu0 0.0
    %87 = vmatpush.msra.mxu0 0.0
    %88 = vmatpush.msra.mxu0 0.0
    %89 = vmatpush.msra.mxu0 0.0
    %90 = vmatpush.msra.mxu0 0.0
    %91 = vmatpush.msra.mxu0 0.0
    %92 = vmatpush.msra.mxu0 0.0
    %93 = vmatpush.msra.mxu0 0.0
    %94 = vmatpush.msra.mxu0 0.0
    %95 = vmatpush.msra.mxu0 0.0
    %96 = vmatpush.msra.mxu0 0.0
    %97 = vmatpush.msra.mxu0 0.0
    %98 = vmatpush.msra.mxu0 0.0
    %99 = vmatpush.msra.mxu0 0.0
    %100 = vmatpush.msra.mxu0 %v83
    %101 = vmatmul.f32.gmra.mxu0 %v79
    %v102 = vpop.f32.mrf.mxu0
    %v103 = vadd.f32 0.0, %v102
    %104 = vdwg.mxu0
    %v105 = vsub.f32 0.0, %v103
    %v106 = vmul.f32 %v105, 1.442695
    %v107 = vpow.pop %v106
    %v108 = vadd.f32 %v107, 1.0
    %v109 = vrcp.pop %v108
    %v110 = vmul.f32 %v108, %v109
    %v111 = vsub.f32 1.0, %v110
    %v112 = vmul.f32 %v109, %v111
    %v113 = vadd.f32 %v109, %v112
    %vm114 = vweird.f32 %v108
    %vm115 = vweird.f32 %v109
    %vm116 = vmor %vm114, %vm115
    %v117 = vsel %vm116, %v109, %v113
    %v118 = vand.u32 2147483647, %v108
    %vm119 = vcmp.eq.f32.partialorder %v118, 8.507059e+37
    %v120 = vand.u32 %v108, 2147483648
    %v121 = vor.u32 1.1754944e-38, %v120
    %v122 = vsel %vm119, %v121, %v117
    %v123 = vmul.f32 1.0, %v122
    %v124 = vperm.slane %v123, 0
    %v125 = vlaneseq
    %v126 = vshrl.u32 %v125, 7
    %128 = vset.pattern.permute.xlu0 %v126
    %129 = vperm.xlu0 %128, %v124
    %v130 = vpop.permute.xlu0 %129
    %v131 = vperm.slane %v123, 1
    %v132 = vlaneseq
    %v133 = vshrl.u32 %v132, 7
    %135 = vset.pattern.permute.xlu0 %v133
    %136 = vperm.xlu0 %135, %v131
    %v137 = vpop.permute.xlu0 %136
    %v138 = vmul.f32 %v31, %v130
    %v139 = vmul.f32 %v32, %v130
    %v140 = vmul.f32 %v33, %v137
    %v141 = vmul.f32 %v34, %v137
    %142 = vst [vmem:[#allocation5] sm:$0xff] %v138
    %143 = vst [vmem:[#allocation5 + $0x8] sm:$0xff] %v139
    %144 = vst [vmem:[#allocation5 + $0x10] sm:$0xff] %v140
    %145 = vst [vmem:[#allocation5 + $0x18] sm:$0xff] %v141
    // Predicated region
    $region18: #{tpu_custom_call.1} parent=1 // pred_check
      _
    $region19: #{tpu_custom_call.1} parent=1 // pred_check_branch
      %147 = sbr.rel (0) target = $region21
    $region20: #{tpu_custom_call.1} parent=1 // pred_region
      %149 = vsyncadd [#allocation4], 0
      %s150 = sshll.u32 [#allocation5], 4
      %s151 = int_to_ptr.vmem [resolvable:$true] %s150
      %s152 = sshll.u32 %s3, 4
      %s153 = int_to_ptr.hbm [resolvable:$true] %s152
      %158 = dma.vmem_to_hbm [thread:$0]  %s151, 512, %s153, [#allocation4], 256, 256, 16
    $region21: #{tpu_custom_call.1} parent=1 // pred_fallthru
      _
    // Predicated region
    $region22: #{tpu_custom_call.1} parent=1 // pred_check
      _
    $region23: #{tpu_custom_call.1} parent=1 // pred_check_branch
      %160 = sbr.rel (0) target = $region25
    $region24: #{tpu_custom_call.1} parent=1 // pred_region
      %162 = dma.done [#allocation4], 512
    $region25: #{tpu_custom_call.1} parent=1 // pred_fallthru
      _
    %163 = vsyncpa [#allocation3], 1
    %164 = vsyncpa [#allocation4], 1

</llo_original>
